<compile_context>
chip_gen: v6e
topology: v6e:2x2x1
jax: 0.10.0
libtpu: 0.0.40
codegen_flags: <defaults>
</compile_context>

<pallas_src>
import jax
import jax.numpy as jnp
from jax.experimental import pallas as pl
from jax.experimental.pallas import tpu as pltpu

BN_EPS = 1e-5
LANES = 128
VMEM_LIMIT = 32 * 1024 * 1024  # safe scoped-VMEM budget on v5e/v6e/v7x


def _round_up(x, m):
    return ((x + m - 1) // m) * m


def _stats_kernel(b_ref, w_ref, sum_ref, sumsq_ref):
    """Pass 1: accumulate per-channel sum(y) and sum(y^2) over all M tiles."""
    @pl.when(pl.program_id(0) == 0)
    def _():
        sum_ref[...] = jnp.zeros_like(sum_ref)
        sumsq_ref[...] = jnp.zeros_like(sumsq_ref)

    y = jnp.dot(b_ref[...].astype(jnp.float32), w_ref[...],
                preferred_element_type=jnp.float32)          # (TM, C_pad)
    sum_ref[...] += jnp.sum(y, axis=0, keepdims=True)
    sumsq_ref[...] += jnp.sum(y * y, axis=0, keepdims=True)


def _normalize_kernel(b_ref, w_ref, scale_ref, shift_ref, o_ref):
    """Pass 2: recompute y = sign(x) @ W_blockdiag and apply folded BN affine."""
    y = jnp.dot(b_ref[...].astype(jnp.float32), w_ref[...],
                preferred_element_type=jnp.float32)          # (TM, C_pad)
    o_ref[...] = (y * scale_ref[...] + shift_ref[...]).astype(o_ref.dtype)


def factorized_reduce(x_nchw, w1, w2, gamma, beta, *, tm=512):
    """x_nchw: (N, C_in, H, W) f32.  w1, w2: (C_in, C_out//2) f32.  gamma/beta: (C_out,) f32."""
    N, C_in, H, W = x_nchw.shape
    C_half = w1.shape[1]
    C_out = 2 * C_half
    assert H % 2 == 0 and W % 2 == 0, "even spatial dims expected so the two branches concat"
    Ho, Wo = H // 2, W // 2
    M = N * Ho * Wo
    K = 2 * C_in
    C_pad = _round_up(C_out, LANES)

    # ---- glue: sign in the wrapper (bf16 is lossless for +/-1/0), stride-2 gather,
    #            NCHW -> (M, 2*C_in) flatten with the two branches concatenated on channels.
    xb = jnp.sign(x_nchw).astype(jnp.bfloat16)
    x1 = jnp.transpose(xb[:, :, 0::2, 0::2], (0, 2, 3, 1)).reshape(M, C_in)
    x2 = jnp.transpose(xb[:, :, 1::2, 1::2], (0, 2, 3, 1)).reshape(M, C_in)
    b = jnp.concatenate([x1, x2], axis=-1)                    # (M, K) bf16

    # Row tiling: TM multiple of 8, M padded to a TM multiple (pad rows are all-zero signs
    # -> contribute exactly 0 to the statistics; they are sliced off the output).
    TM = min(tm, _round_up(M, 8))
    M_pad = _round_up(M, TM)
    if M_pad != M:
        b = jnp.pad(b, ((0, M_pad - M), (0, 0)))
    grid = (M_pad // TM,)

    # Block-diagonal fused weight (f32, channel-padded to a lane-dense multiple of 128).
    w_bd = jnp.zeros((K, C_pad), dtype=jnp.float32)
    w_bd = w_bd.at[:C_in, :C_half].set(w1.astype(jnp.float32))
    w_bd = w_bd.at[C_in:, C_half:C_out].set(w2.astype(jnp.float32))

    gamma_pad = jnp.zeros((C_pad,), jnp.float32).at[:C_out].set(gamma.astype(jnp.float32))
    beta_pad = jnp.zeros((C_pad,), jnp.float32).at[:C_out].set(beta.astype(jnp.float32))

    matmul_flops = 2 * M_pad * K * C_pad
    in_bytes = M_pad * K * 2 + K * C_pad * 4

    # ---------------- pass 1: global per-channel statistics ----------------
    sums, sumsqs = pl.pallas_call(
        _stats_kernel,
        out_shape=(jax.ShapeDtypeStruct((1, C_pad), jnp.float32),
                   jax.ShapeDtypeStruct((1, C_pad), jnp.float32)),
        grid_spec=pl.GridSpec(
            grid=grid,
            in_specs=[
                pl.BlockSpec((TM, K), lambda i: (i, 0)),
                pl.BlockSpec((K, C_pad), lambda i: (0, 0)),
            ],
            out_specs=[
                pl.BlockSpec((1, C_pad), lambda i: (0, 0)),
                pl.BlockSpec((1, C_pad), lambda i: (0, 0)),
            ],
        ),
        compiler_params=pltpu.CompilerParams(
            dimension_semantics=("arbitrary",),   # resident accumulator across M tiles
            vmem_limit_bytes=VMEM_LIMIT,
        ),
        cost_estimate=pl.CostEstimate(
            flops=matmul_flops + 4 * M_pad * C_pad,
            transcendentals=0,
            bytes_accessed=in_bytes + 2 * C_pad * 4,
        ),
    )(b, w_bd)

    # Finalize BN (training-mode batch stats) on tiny (1, C_pad) arrays; fold the affine.
    mean = sums / float(M)
    var = jnp.maximum(sumsqs / float(M) - mean * mean, 0.0)
    inv = jax.lax.rsqrt(var + BN_EPS)
    scale = inv * gamma_pad[None, :]                          # (1, C_pad)
    shift = beta_pad[None, :] - mean * scale                  # (1, C_pad)

    # ---------------- pass 2: recompute + normalize (independent tiles) ----------------
    y_pad = pl.pallas_call(
        _normalize_kernel,
        out_shape=jax.ShapeDtypeStruct((M_pad, C_pad), jnp.float32),
        grid_spec=pl.GridSpec(
            grid=grid,
            in_specs=[
                pl.BlockSpec((TM, K), lambda i: (i, 0)),
                pl.BlockSpec((K, C_pad), lambda i: (0, 0)),
                pl.BlockSpec((1, C_pad), lambda i: (0, 0)),
                pl.BlockSpec((1, C_pad), lambda i: (0, 0)),
            ],
            out_specs=pl.BlockSpec((TM, C_pad), lambda i: (i, 0)),
        ),
        compiler_params=pltpu.CompilerParams(
            dimension_semantics=("parallel",),    # shard across TCs on v7x megacore
            vmem_limit_bytes=VMEM_LIMIT,
        ),
        cost_estimate=pl.CostEstimate(
            flops=matmul_flops + 2 * M_pad * C_pad,
            transcendentals=0,
            bytes_accessed=in_bytes + 2 * C_pad * 4 + M_pad * C_pad * 4,
        ),
    )(b, w_bd, scale, shift)

    # ---- glue: strip padding, back to NCHW ----
    y = y_pad[:M, :C_out].reshape(N, Ho, Wo, C_out)
    return jnp.transpose(y, (0, 3, 1, 2))


def _reference(x_nchw, w1, w2, gamma, beta):
    """Pure-JAX reference mirroring the PyTorch forward (training-mode BN)."""
    xb = jnp.sign(x_nchw)
    x1 = xb[:, :, 0::2, 0::2]
    x2 = xb[:, :, 1::2, 1::2]
    y1 = jnp.einsum("nchw,co->nohw", x1, w1)
    y2 = jnp.einsum("nchw,co->nohw", x2, w2)
    y = jnp.concatenate([y1, y2], axis=1)
    mean = jnp.mean(y, axis=(0, 2, 3), keepdims=True)
    var = jnp.mean((y - mean) ** 2, axis=(0, 2, 3), keepdims=True)
    g = gamma.reshape(1, -1, 1, 1)
    b = beta.reshape(1, -1, 1, 1)
    return (y - mean) * jax.lax.rsqrt(var + BN_EPS) * g + b


if __name__ == "__main__":
    key = jax.random.PRNGKey(0)
    N, C_in, H, W = 2, 4, 16, 16
    C_out = 8                              # must be even
    C_half = C_out // 2

    k_x, k_w1, k_w2 = jax.random.split(key, 3)
    x = jax.random.normal(k_x, (N, C_in, H, W), dtype=jnp.float32)

    # Conv weights are (C_out//2, C_in, 1, 1) in PyTorch; stored transposed as (C_in, C_out//2).
    w1 = 0.1 * jax.random.normal(k_w1, (C_in, C_half), dtype=jnp.float32)
    w2 = 0.1 * jax.random.normal(k_w2, (C_in, C_half), dtype=jnp.float32)
    # BatchNorm2d(affine=True) default init: weight=1, bias=0.
    gamma = jnp.ones((C_out,), dtype=jnp.float32)
    beta = jnp.zeros((C_out,), dtype=jnp.float32)

    out = factorized_reduce(x, w1, w2, gamma, beta)
    out = jax.block_until_ready(out)

    ref = _reference(x, w1, w2, gamma, beta)
    assert out.shape == (N, C_out, H // 2, W // 2)
    assert jnp.allclose(out, ref, atol=1e-4, rtol=1e-4), "mismatch vs reference"

    print("KERNEL_OK")
</pallas_src>

<mosaic_0001>
module attributes {stable_mosaic.version = 11 : i64} {
  func.func @_stats_kernel(%arg0: i32, %arg1: memref<128x8xbf16, #tpu.memory_space<vmem>>, %arg2: memref<8x128xf32, #tpu.memory_space<vmem>>, %arg3: memref<1x128xf32, #tpu.memory_space<vmem>>, %arg4: memref<1x128xf32, #tpu.memory_space<vmem>>) attributes {dimension_semantics = [#tpu.dimension_semantics<arbitrary>], iteration_bounds = array<i64: 1>, scalar_prefetch = 0 : i64, scratch_operands = 0 : i64, tpu.core_type = #tpu.core_type<tc>, window_params = [{transform_indices = @transform_0, window_bounds = array<i64: 128, 8>}, {pipeline_mode = #tpu.pipeline_mode<synchronous>, transform_indices = @transform_1, window_bounds = array<i64: 8, 128>}, {pipeline_mode = #tpu.pipeline_mode<synchronous>, transform_indices = @transform_2, window_bounds = array<i64: 1, 128>}, {pipeline_mode = #tpu.pipeline_mode<synchronous>, transform_indices = @transform_3, window_bounds = array<i64: 1, 128>}]} {
    %c0_i32 = arith.constant 0 : i32
    %0 = arith.cmpi eq, %arg0, %c0_i32 : i32
    %1 = arith.extui %0 : i1 to i32
    %c0_i32_0 = arith.constant 0 : i32
    %2 = arith.cmpi ne, %1, %c0_i32_0 : i32
    scf.if %2 {
      %cst_14 = arith.constant 0.000000e+00 : f32
      %18 = vector.broadcast %cst_14 : f32 to vector<1x128xf32>
      %c0_15 = arith.constant 0 : index
      %c0_16 = arith.constant 0 : index
      %19 = vector.load %arg3[%c0_15, %c0_16] : memref<1x128xf32, #tpu.memory_space<vmem>>, vector<1x128xf32>
      tpu.vector_store %arg3[%c0_15, %c0_16], %18 {strides = array<i32>} : memref<1x128xf32, #tpu.memory_space<vmem>>, vector<1x128xf32>,
      %cst_17 = arith.constant 0.000000e+00 : f32
      %20 = vector.broadcast %cst_17 : f32 to vector<1x128xf32>
      %c0_18 = arith.constant 0 : index
      %c0_19 = arith.constant 0 : index
      %21 = vector.load %arg4[%c0_18, %c0_19] : memref<1x128xf32, #tpu.memory_space<vmem>>, vector<1x128xf32>
      tpu.vector_store %arg4[%c0_18, %c0_19], %20 {strides = array<i32>} : memref<1x128xf32, #tpu.memory_space<vmem>>, vector<1x128xf32>,
    } else {
    }
    %c0 = arith.constant 0 : index
    %c0_1 = arith.constant 0 : index
    %3 = vector.load %arg1[%c0, %c0_1] : memref<128x8xbf16, #tpu.memory_space<vmem>>, vector<128x8xbf16>
    %4 = arith.extf %3 : vector<128x8xbf16> to vector<128x8xf32>
    %c0_2 = arith.constant 0 : index
    %c0_3 = arith.constant 0 : index
    %5 = vector.load %arg2[%c0_2, %c0_3] : memref<8x128xf32, #tpu.memory_space<vmem>>, vector<8x128xf32>
    %cst = arith.constant dense<0.000000e+00> : vector<128x128xf32>
    %6 = tpu.matmul %4, %5, %cst {dimension_numbers = #tpu.dot_dimension_numbers<[1], [0], [0], [1], [0, 0, 1, 1], [], []>} : vector<128x8xf32>, vector<8x128xf32>, vector<128x128xf32> -> vector<128x128xf32>
    %c0_4 = arith.constant 0 : index
    %c0_5 = arith.constant 0 : index
    %7 = vector.load %arg3[%c0_4, %c0_5] : memref<1x128xf32, #tpu.memory_space<vmem>>, vector<1x128xf32>
    %cst_6 = arith.constant dense<0.000000e+00> : vector<128xf32>
    %8 = vector.multi_reduction <add>, %6, %cst_6 [0] : vector<128x128xf32> to vector<128xf32>
    %9 = vector.shape_cast %8 : vector<128xf32> to vector<1x128xf32>
    %10 = arith.addf %7, %9 : vector<1x128xf32>
    %c0_7 = arith.constant 0 : index
    %c0_8 = arith.constant 0 : index
    %11 = vector.load %arg3[%c0_7, %c0_8] : memref<1x128xf32, #tpu.memory_space<vmem>>, vector<1x128xf32>
    tpu.vector_store %arg3[%c0_7, %c0_8], %10 {strides = array<i32>} : memref<1x128xf32, #tpu.memory_space<vmem>>, vector<1x128xf32>,
    %c0_9 = arith.constant 0 : index
    %c0_10 = arith.constant 0 : index
    %12 = vector.load %arg4[%c0_9, %c0_10] : memref<1x128xf32, #tpu.memory_space<vmem>>, vector<1x128xf32>
    %13 = arith.mulf %6, %6 : vector<128x128xf32>
    %cst_11 = arith.constant dense<0.000000e+00> : vector<128xf32>
    %14 = vector.multi_reduction <add>, %13, %cst_11 [0] : vector<128x128xf32> to vector<128xf32>
    %15 = vector.shape_cast %14 : vector<128xf32> to vector<1x128xf32>
    %16 = arith.addf %12, %15 : vector<1x128xf32>
    %c0_12 = arith.constant 0 : index
    %c0_13 = arith.constant 0 : index
    %17 = vector.load %arg4[%c0_12, %c0_13] : memref<1x128xf32, #tpu.memory_space<vmem>>, vector<1x128xf32>
    tpu.vector_store %arg4[%c0_12, %c0_13], %16 {strides = array<i32>} : memref<1x128xf32, #tpu.memory_space<vmem>>, vector<1x128xf32>,
    return
  }
  func.func @transform_0(%arg0: i32) -> (i32, i32) {
    %c0_i32 = arith.constant 0 : i32
    %c0_i32_0 = arith.constant 0 : i32
    return %arg0, %c0_i32 : i32, i32
  }
  func.func @transform_1(%arg0: i32) -> (i32, i32) {
    %c0_i32 = arith.constant 0 : i32
    %c0_i32_0 = arith.constant 0 : i32
    %c0_i32_1 = arith.constant 0 : i32
    return %c0_i32, %c0_i32_0 : i32, i32
  }
  func.func @transform_2(%arg0: i32) -> (i32, i32) {
    %c0_i32 = arith.constant 0 : i32
    %c0_i32_0 = arith.constant 0 : i32
    %c0_i32_1 = arith.constant 0 : i32
    return %c0_i32, %c0_i32_0 : i32, i32
  }
  func.func @transform_3(%arg0: i32) -> (i32, i32) {
    %c0_i32 = arith.constant 0 : i32
    %c0_i32_0 = arith.constant 0 : i32
    %c0_i32_1 = arith.constant 0 : i32
    return %c0_i32, %c0_i32_0 : i32, i32
  }
}

</mosaic_0001>

<llo_original>
// kernel: tpu_custom_call.1
$region0: #{tpu_custom_call.1}
  #allocation0 [shape = 'u32[]', space=smem, size = 0x4, offset = 0x4, fixed_abs, tag = 'smem constant byte address 0x4 - core index']
  #allocation1 [shape = 'u32[144,128]{1,0:T(1,128)}', space=vmem, size = 0x12000, scoped, tag = 'internal scratch']
  %s0 = inlined_call_operand.vmem [shape: bf16[128,8], index: 0, kind: input, shape index: {}]
  %s1 = inlined_call_operand.vmem [shape: f32[8,128], index: 1, kind: input, shape index: {}]
  %s2 = inlined_call_operand.hbm [shape: f32[1,128], index: 2, kind: output, shape index: {0}]
  %s3 = inlined_call_operand.hbm [shape: f32[1,128], index: 3, kind: output, shape index: {1}]
  %4 = xla_tuple %s2, %s3
  %s5 = sld [smem:[#allocation0]]
  $region30: #{tpu_custom_call.1} parent=0
    _
  %s7 = ssub.s32 1, %s5
  %s8 = scalar_select 0, %s7, %s5
  $region1: #{tpu_custom_call.1} parent=0
    #allocation2 [shape = 'u8[512]{0}', space=vmem, size = 0x400, scoped, tag = 'output window, operand 0, single buffered']
    #allocation3 [shape = 's32[1]{0}', space=sflag, size = 0x4, scoped, tag = 'scoped memory for tpu_custom_call.1']
    #allocation4 [shape = 'u8[512]{0}', space=vmem, size = 0x400, scoped, tag = 'output window, operand 1, single buffered']
    #allocation5 [shape = 's32[1]{0}', space=sflag, size = 0x4, scoped, tag = 'scoped memory for tpu_custom_call.1']
    %9 = vsyncpa [#allocation3], 0
    %10 = vsyncpa [#allocation5], 0
    // Predicated region
    $region2: #{tpu_custom_call.1} parent=1 // pred_check
      _
    $region3: #{tpu_custom_call.1} parent=1 // pred_check_branch
      %12 = sbr.rel (0) target = $region5
    $region4: #{tpu_custom_call.1} parent=1 // pred_region
      _
    $region5: #{tpu_custom_call.1} parent=1 // pred_fallthru
      _
    // Predicated region
    $region6: #{tpu_custom_call.1} parent=1 // pred_check
      _
    $region7: #{tpu_custom_call.1} parent=1 // pred_check_branch
      %14 = sbr.rel (0) target = $region9
    $region8: #{tpu_custom_call.1} parent=1 // pred_region
      _
    $region9: #{tpu_custom_call.1} parent=1 // pred_fallthru
      _
    %p15 = scmp.eq.s32.totalorder 0, 0
    // Predicated region
    $region10: #{tpu_custom_call.1} parent=1 // pred_check
      %p16 = pneg %p15
    $region11: #{tpu_custom_call.1} parent=1 // pred_check_branch
      %18 = sbr.rel (%p16) target = $region13
    $region12: #{tpu_custom_call.1} parent=1 // pred_region
      %19 = vst [vmem:[#allocation2] sm:$0x1] 0.0
      %20 = vst [vmem:[#allocation4] sm:$0x1] 0.0
    $region13: #{tpu_custom_call.1} parent=1 // pred_fallthru
      _
    %v21 = vld [vmem:[%s0] sm:$0xf]
    %v22 = vld [vmem:[%s0 + $0x4] sm:$0xf]
    %v23 = vld [vmem:[%s0 + $0x8] sm:$0xf]
    %v24 = vld [vmem:[%s0 + $0xc] sm:$0xf]
    %v25 = vld [vmem:[%s0 + $0x10] sm:$0xf]
    %v26 = vld [vmem:[%s0 + $0x14] sm:$0xf]
    %v27 = vld [vmem:[%s0 + $0x18] sm:$0xf]
    %v28 = vld [vmem:[%s0 + $0x1c] sm:$0xf]
    %v29 = vld [vmem:[%s0 + $0x20] sm:$0xf]
    %v30 = vld [vmem:[%s0 + $0x24] sm:$0xf]
    %v31 = vld [vmem:[%s0 + $0x28] sm:$0xf]
    %v32 = vld [vmem:[%s0 + $0x2c] sm:$0xf]
    %v33 = vld [vmem:[%s0 + $0x30] sm:$0xf]
    %v34 = vld [vmem:[%s0 + $0x34] sm:$0xf]
    %v35 = vld [vmem:[%s0 + $0x38] sm:$0xf]
    %v36 = vld [vmem:[%s0 + $0x3c] sm:$0xf]
    %v37 = vunpack.c.l.bf16 %v21
    %v38 = vunpack.c.l.bf16 %v22
    %v39 = vunpack.c.l.bf16 %v23
    %v40 = vunpack.c.l.bf16 %v24
    %v41 = vunpack.c.l.bf16 %v25
    %v42 = vunpack.c.l.bf16 %v26
    %v43 = vunpack.c.l.bf16 %v27
    %v44 = vunpack.c.l.bf16 %v28
    %v45 = vunpack.c.l.bf16 %v29
    %v46 = vunpack.c.l.bf16 %v30
    %v47 = vunpack.c.l.bf16 %v31
    %v48 = vunpack.c.l.bf16 %v32
    %v49 = vunpack.c.l.bf16 %v33
    %v50 = vunpack.c.l.bf16 %v34
    %v51 = vunpack.c.l.bf16 %v35
    %v52 = vunpack.c.l.bf16 %v36
    %v53 = vld [vmem:[%s1] sm:$0xff]
    %vm54 = vcmask 64512
    %v56 = vsel %vm54, %v37, 0
    %v59 = vsel %vm54, %v38, 0
    %v62 = vsel %vm54, %v39, 0
    %v65 = vsel %vm54, %v40, 0
    %v68 = vsel %vm54, %v41, 0
    %v71 = vsel %vm54, %v42, 0
    %v74 = vsel %vm54, %v43, 0
    %v77 = vsel %vm54, %v44, 0
    %v80 = vsel %vm54, %v45, 0
    %v83 = vsel %vm54, %v46, 0
    %v86 = vsel %vm54, %v47, 0
    %v89 = vsel %vm54, %v48, 0
    %v92 = vsel %vm54, %v49, 0
    %v95 = vsel %vm54, %v50, 0
    %v98 = vsel %vm54, %v51, 0
    %v101 = vsel %vm54, %v52, 0
    %103 = vmatprep.subr.mxu0 0.0
    %104 = vmatpush1.msra.mxu0 0.0
    %105 = vmatprep.subr.mxu0 0.0
    %106 = vmatpush1.msra.mxu0 0.0
    %107 = vmatprep.subr.mxu0 0.0
    %108 = vmatpush1.msra.mxu0 0.0
    %109 = vmatprep.subr.mxu0 0.0
    %110 = vmatpush1.msra.mxu0 0.0
    %111 = vmatprep.subr.mxu0 0.0
    %112 = vmatpush1.msra.mxu0 0.0
    %113 = vmatprep.subr.mxu0 0.0
    %114 = vmatpush1.msra.mxu0 0.0
    %115 = vmatprep.subr.mxu0 0.0
    %116 = vmatpush1.msra.mxu0 0.0
    %117 = vmatprep.subr.mxu0 0.0
    %118 = vmatpush1.msra.mxu0 0.0
    %119 = vmatprep.subr.mxu0 0.0
    %120 = vmatpush1.msra.mxu0 0.0
    %121 = vmatprep.subr.mxu0 0.0
    %122 = vmatpush1.msra.mxu0 0.0
    %123 = vmatprep.subr.mxu0 0.0
    %124 = vmatpush1.msra.mxu0 0.0
    %125 = vmatprep.subr.mxu0 0.0
    %126 = vmatpush1.msra.mxu0 0.0
    %127 = vmatprep.subr.mxu0 0.0
    %128 = vmatpush1.msra.mxu0 0.0
    %129 = vmatprep.subr.mxu0 0.0
    %130 = vmatpush1.msra.mxu0 0.0
    %131 = vmatprep.subr.mxu0 0.0
    %132 = vmatpush1.msra.mxu0 0.0
    %133 = vmatprep.subr.mxu0 0.0
    %134 = vmatpush1.msra.mxu0 %v53
    %135 = vmatprep.subr.mxu0 0.0
    %136 = vmatpush2.msra.mxu0 0.0
    %137 = vmatprep.subr.mxu0 0.0
    %138 = vmatpush2.msra.mxu0 0.0
    %139 = vmatprep.subr.mxu0 0.0
    %140 = vmatpush2.msra.mxu0 0.0
    %141 = vmatprep.subr.mxu0 0.0
    %142 = vmatpush2.msra.mxu0 0.0
    %143 = vmatprep.subr.mxu0 0.0
    %144 = vmatpush2.msra.mxu0 0.0
    %145 = vmatprep.subr.mxu0 0.0
    %146 = vmatpush2.msra.mxu0 0.0
    %147 = vmatprep.subr.mxu0 0.0
    %148 = vmatpush2.msra.mxu0 0.0
    %149 = vmatprep.subr.mxu0 0.0
    %150 = vmatpush2.msra.mxu0 0.0
    %151 = vmatprep.subr.mxu0 0.0
    %152 = vmatpush2.msra.mxu0 0.0
    %153 = vmatprep.subr.mxu0 0.0
    %154 = vmatpush2.msra.mxu0 0.0
    %155 = vmatprep.subr.mxu0 0.0
    %156 = vmatpush2.msra.mxu0 0.0
    %157 = vmatprep.subr.mxu0 0.0
    %158 = vmatpush2.msra.mxu0 0.0
    %159 = vmatprep.subr.mxu0 0.0
    %160 = vmatpush2.msra.mxu0 0.0
    %161 = vmatprep.subr.mxu0 0.0
    %162 = vmatpush2.msra.mxu0 0.0
    %163 = vmatprep.subr.mxu0 0.0
    %164 = vmatpush2.msra.mxu0 0.0
    %165 = vmatprep.subr.mxu0 0.0
    %166 = vmatpush2.msra.mxu0 0.0
    %167 = vmatprep.mubr.f32.mxu0 0.0
    %168 = vmatmul.mubr.f32.gmra.mxu0 %v56
    %v169 = vpop.f32.mrf.mxu0
    %v170 = vadd.f32 0.0, %v169
    %v171 = vpop.f32.mrf.mxu0
    %172 = vmatprep.mubr.f32.mxu0 0.0
    %173 = vmatmul.mubr.f32.gmra.mxu0 %v59
    %v174 = vpop.f32.mrf.mxu0
    %v175 = vadd.f32 0.0, %v174
    %v176 = vpop.f32.mrf.mxu0
    %177 = vmatprep.mubr.f32.mxu0 0.0
    %178 = vmatmul.mubr.f32.gmra.mxu0 %v62
    %v179 = vpop.f32.mrf.mxu0
    %v180 = vadd.f32 0.0, %v179
    %v181 = vpop.f32.mrf.mxu0
    %182 = vmatprep.mubr.f32.mxu0 0.0
    %183 = vmatmul.mubr.f32.gmra.mxu0 %v65
    %v184 = vpop.f32.mrf.mxu0
    %v185 = vadd.f32 0.0, %v184
    %v186 = vpop.f32.mrf.mxu0
    %187 = vmatprep.mubr.f32.mxu0 0.0
    %188 = vmatmul.mubr.f32.gmra.mxu0 %v68
    %v189 = vpop.f32.mrf.mxu0
    %v190 = vadd.f32 0.0, %v189
    %v191 = vpop.f32.mrf.mxu0
    %192 = vmatprep.mubr.f32.mxu0 0.0
    %193 = vmatmul.mubr.f32.gmra.mxu0 %v71
    %v194 = vpop.f32.mrf.mxu0
    %v195 = vadd.f32 0.0, %v194
    %v196 = vpop.f32.mrf.mxu0
    %197 = vmatprep.mubr.f32.mxu0 0.0
    %198 = vmatmul.mubr.f32.gmra.mxu0 %v74
    %v199 = vpop.f32.mrf.mxu0
    %v200 = vadd.f32 0.0, %v199
    %v201 = vpop.f32.mrf.mxu0
    %202 = vmatprep.mubr.f32.mxu0 0.0
    %203 = vmatmul.mubr.f32.gmra.mxu0 %v77
    %v204 = vpop.f32.mrf.mxu0
    %v205 = vadd.f32 0.0, %v204
    %v206 = vpop.f32.mrf.mxu0
    %207 = vmatprep.mubr.f32.mxu0 0.0
    %208 = vmatmul.mubr.f32.gmra.mxu0 %v80
    %v209 = vpop.f32.mrf.mxu0
    %v210 = vadd.f32 0.0, %v209
    %v211 = vpop.f32.mrf.mxu0
    %212 = vmatprep.mubr.f32.mxu0 0.0
    %213 = vmatmul.mubr.f32.gmra.mxu0 %v83
    %v214 = vpop.f32.mrf.mxu0
    %v215 = vadd.f32 0.0, %v214
    %v216 = vpop.f32.mrf.mxu0
    %217 = vmatprep.mubr.f32.mxu0 0.0
    %218 = vmatmul.mubr.f32.gmra.mxu0 %v86
    %v219 = vpop.f32.mrf.mxu0
    %v220 = vadd.f32 0.0, %v219
    %v221 = vpop.f32.mrf.mxu0
    %222 = vmatprep.mubr.f32.mxu0 0.0
    %223 = vmatmul.mubr.f32.gmra.mxu0 %v89
    %v224 = vpop.f32.mrf.mxu0
    %v225 = vadd.f32 0.0, %v224
    %v226 = vpop.f32.mrf.mxu0
    %227 = vmatprep.mubr.f32.mxu0 0.0
    %228 = vmatmul.mubr.f32.gmra.mxu0 %v92
    %v229 = vpop.f32.mrf.mxu0
    %v230 = vadd.f32 0.0, %v229
    %v231 = vpop.f32.mrf.mxu0
    %232 = vmatprep.mubr.f32.mxu0 0.0
    %233 = vmatmul.mubr.f32.gmra.mxu0 %v95
    %v234 = vpop.f32.mrf.mxu0
    %v235 = vadd.f32 0.0, %v234
    %v236 = vpop.f32.mrf.mxu0
    %237 = vmatprep.mubr.f32.mxu0 0.0
    %238 = vmatmul.mubr.f32.gmra.mxu0 %v98
    %v239 = vpop.f32.mrf.mxu0
    %v240 = vadd.f32 0.0, %v239
    %v241 = vpop.f32.mrf.mxu0
    %242 = vmatprep.mubr.f32.mxu0 0.0
    %243 = vmatmul.mubr.f32.gmra.mxu0 %v101
    %v244 = vpop.f32.mrf.mxu0
    %v245 = vadd.f32 0.0, %v244
    %v246 = vpop.f32.mrf.mxu0
    %247 = vdwg.mxu0
    %v248 = vld [vmem:[#allocation2] sm:$0x1]
    %v249 = vadd.f32 %v170, %v175
    %v250 = vadd.f32 %v249, %v180
    %v251 = vadd.f32 %v250, %v185
    %v252 = vadd.f32 %v251, %v190
    %v253 = vadd.f32 %v252, %v195
    %v254 = vadd.f32 %v253, %v200
    %v255 = vadd.f32 %v254, %v205
    %v256 = vadd.f32 %v255, %v210
    %v257 = vadd.f32 %v256, %v215
    %v258 = vadd.f32 %v257, %v220
    %v259 = vadd.f32 %v258, %v225
    %v260 = vadd.f32 %v259, %v230
    %v261 = vadd.f32 %v260, %v235
    %v262 = vadd.f32 %v261, %v240
    %v263 = vadd.f32 %v262, %v245
    %v264 = vrot.slane %v263, 4
    %v265 = vadd.f32 %v263, %v264
    %v266 = vrot.slane %v265, 2
    %v267 = vadd.f32 %v265, %v266
    %v268 = vrot.slane %v267, 1
    %v269 = vadd.f32 %v267, %v268
    %v270 = vadd.f32 %v248, %v269
    %271 = vst [vmem:[#allocation2] sm:$0x1] %v270
    %v272 = vld [vmem:[#allocation4] sm:$0x1]
    %v273 = vmul.f32 %v170, %v170
    %v274 = vmul.f32 %v175, %v175
    %v275 = vmul.f32 %v180, %v180
    %v276 = vmul.f32 %v185, %v185
    %v277 = vmul.f32 %v190, %v190
    %v278 = vmul.f32 %v195, %v195
    %v279 = vmul.f32 %v200, %v200
    %v280 = vmul.f32 %v205, %v205
    %v281 = vmul.f32 %v210, %v210
    %v282 = vmul.f32 %v215, %v215
    %v283 = vmul.f32 %v220, %v220
    %v284 = vmul.f32 %v225, %v225
    %v285 = vmul.f32 %v230, %v230
    %v286 = vmul.f32 %v235, %v235
    %v287 = vmul.f32 %v240, %v240
    %v288 = vmul.f32 %v245, %v245
    %v289 = vadd.f32 %v273, %v274
    %v290 = vadd.f32 %v289, %v275
    %v291 = vadd.f32 %v290, %v276
    %v292 = vadd.f32 %v291, %v277
    %v293 = vadd.f32 %v292, %v278
    %v294 = vadd.f32 %v293, %v279
    %v295 = vadd.f32 %v294, %v280
    %v296 = vadd.f32 %v295, %v281
    %v297 = vadd.f32 %v296, %v282
    %v298 = vadd.f32 %v297, %v283
    %v299 = vadd.f32 %v298, %v284
    %v300 = vadd.f32 %v299, %v285
    %v301 = vadd.f32 %v300, %v286
    %v302 = vadd.f32 %v301, %v287
    %v303 = vadd.f32 %v302, %v288
    %v304 = vrot.slane %v303, 4
    %v305 = vadd.f32 %v303, %v304
    %v306 = vrot.slane %v305, 2
    %v307 = vadd.f32 %v305, %v306
    %v308 = vrot.slane %v307, 1
    %v309 = vadd.f32 %v307, %v308
    %v310 = vadd.f32 %v272, %v309
    %311 = vst [vmem:[#allocation4] sm:$0x1] %v310
    // Predicated region
    $region14: #{tpu_custom_call.1} parent=1 // pred_check
      _
    $region15: #{tpu_custom_call.1} parent=1 // pred_check_branch
      %313 = sbr.rel (0) target = $region17
    $region16: #{tpu_custom_call.1} parent=1 // pred_region
      %s315 = ssub.s32 16, 16
      %316 = vsyncadd [#allocation3], %s315
      %s318 = sshll.u32 [#allocation2], 4
      %s319 = int_to_ptr.vmem [resolvable:$true] %s318
      %321 = dma.vmem_to_hbm [thread:$0]  %s319, 16, %s2, [#allocation3]
    $region17: #{tpu_custom_call.1} parent=1 // pred_fallthru
      _
    // Predicated region
    $region18: #{tpu_custom_call.1} parent=1 // pred_check
      _
    $region19: #{tpu_custom_call.1} parent=1 // pred_check_branch
      %323 = sbr.rel (0) target = $region21
    $region20: #{tpu_custom_call.1} parent=1 // pred_region
      %s325 = ssub.s32 16, 16
      %326 = vsyncadd [#allocation5], %s325
      %s328 = sshll.u32 [#allocation4], 4
      %s329 = int_to_ptr.vmem [resolvable:$true] %s328
      %331 = dma.vmem_to_hbm [thread:$0]  %s329, 16, %s3, [#allocation5]
    $region21: #{tpu_custom_call.1} parent=1 // pred_fallthru
      _
    // Predicated region
    $region22: #{tpu_custom_call.1} parent=1 // pred_check
      _
    $region23: #{tpu_custom_call.1} parent=1 // pred_check_branch
      %333 = sbr.rel (0) target = $region25
    $region24: #{tpu_custom_call.1} parent=1 // pred_region
      %334 = dma.done [#allocation3], 16
    $region25: #{tpu_custom_call.1} parent=1 // pred_fallthru
      _
    // Predicated region
    $region26: #{tpu_custom_call.1} parent=1 // pred_check
      _
    $region27: #{tpu_custom_call.1} parent=1 // pred_check_branch
      %336 = sbr.rel (0) target = $region29
    $region28: #{tpu_custom_call.1} parent=1 // pred_region
      %337 = dma.done [#allocation5], 16
    $region29: #{tpu_custom_call.1} parent=1 // pred_fallthru
      _
    %338 = vsyncpa [#allocation3], 1
    %339 = vsyncpa [#allocation5], 1

</llo_original>
